<compile_context>
chip_gen: v6e
topology: v6e:2x2x1
jax: 0.10.0
libtpu: 0.0.40
codegen_flags: <defaults>
</compile_context>

<pallas_src>
import functools

import jax
import jax.numpy as jnp
from jax.experimental import pallas as pl
from jax.experimental.pallas import tpu as pltpu

_LANE = 128
_SUBLANE = 8

# Fallback thresholds for the one-hot-matmul path.
_MAX_ONEHOT_ROWS = 2048              # beyond this the matmul dominates output DMA
_MAX_RESIDENT_TABLE_BYTES = 16 << 20  # double-buffered table budget (v7x-safe)


def _round_up(x: int, m: int) -> int:
    return (x + m - 1) // m * m


def _class_embed_kernel(idx_ref, table_ref, o_ref):
    # idx_ref:   (T, 1)      int32  class ids for this token block
    # table_ref: (V_pad, E)  embedding table (VMEM-resident across the grid)
    # o_ref:     (T, E)      gathered embeddings for this block (lane-dense)
    idx = idx_ref[...]                       # (T, 1)
    t = idx.shape[0]
    v_pad = table_ref.shape[0]
    # One-hot gather on the MXU: (T, V_pad) @ (V_pad, E), f32 accumulation.
    class_ids = jax.lax.broadcasted_iota(jnp.int32, (t, v_pad), 1)
    onehot = (idx == class_ids).astype(table_ref.dtype)      # (T, V_pad)
    o_ref[...] = jnp.dot(
        onehot, table_ref[...], preferred_element_type=jnp.float32
    ).astype(o_ref.dtype)


@functools.partial(jax.jit, static_argnames=("block_rows",))
def _class_embed_pallas(idx_flat, table_padded, *, block_rows: int):
    """Pallas one-hot gather. idx_flat: (n,) int32; table_padded: (V_pad, E)."""
    n = idx_flat.shape[0]
    v_pad, e = table_padded.shape

    block_rows = max(_SUBLANE, _round_up(block_rows, _SUBLANE))
    # Token-block size: multiple of 8 sublanes, capped at block_rows; for
    # mid-sized n keep at least two grid steps so v7x's 2 TCs both get work.
    t = min(block_rows, _round_up(n, _SUBLANE))
    if n > _SUBLANE and _round_up(n, t) // t < 2:
        t = _round_up((n + 1) // 2, _SUBLANE)
    n_pad = _round_up(n, t)
    idx_p = jnp.pad(idx_flat, (0, n_pad - n)).reshape(n_pad, 1)

    # Explicit VMEM budget: v5e's default scoped limit (~16 MiB) is too small
    # for T=1024, E=768 with double-buffered outputs.  The estimate is bounded
    # because the caller routes huge tables to the jnp.take fallback.
    itemsize = table_padded.dtype.itemsize
    est = (
        2 * v_pad * e * itemsize      # double-buffered resident table
        + 2 * t * e * itemsize        # double-buffered output tiles
        + 2 * t * _LANE * 4           # (T,1) int32 idx tiles lane-pad to (T,128)
        + t * v_pad * 4               # one-hot intermediate
        + t * e * 4                   # f32 matmul accumulator
    )
    vmem_limit = int(min(64 << 20, max(32 << 20, 2 * est)))

    out_flat = pl.pallas_call(
        _class_embed_kernel,
        out_shape=jax.ShapeDtypeStruct((n_pad, e), table_padded.dtype),
        grid_spec=pltpu.PrefetchScalarGridSpec(
            num_scalar_prefetch=0,
            grid=(n_pad // t,),
            in_specs=[
                # (T, 1) block of indices per grid step.
                pl.BlockSpec((t, 1), lambda i: (i, 0)),
                # Whole padded table, constant block index -> DMA'd once per
                # core and reused across the grid.
                # TODO(synk): pipeline_mode=pl.Buffered(1) would single-buffer
                # this constant block and halve its VMEM footprint on v7x once
                # buffer_count=1 is universally supported by the pipeliner.
                pl.BlockSpec((v_pad, e), lambda i: (0, 0)),
            ],
            out_specs=pl.BlockSpec((t, e), lambda i: (i, 0)),
        ),
        compiler_params=pltpu.CompilerParams(
            dimension_semantics=("parallel",),   # independent blocks; v7x 2-TC
            vmem_limit_bytes=vmem_limit,
        ),
    )(idx_p, table_padded)

    return out_flat[:n]


def class_encoder_forward(x, table, *, table_padded=None, block_rows: int = 1024):
    """Equivalent of ClassEncoder.forward: table[x].

    x:            integer array of arbitrary shape, values in [0, V).
    table:        (V, E) embedding table (V = num_classes + 1).
    table_padded: optional precomputed (V_pad, E) lane-padded table (hoisted
                  out of the per-call path; see ClassEncoder.__init__).
    returns: array of shape x.shape + (E,), dtype of `table`.
    """
    v, e = table.shape
    flat_idx = x.reshape(-1).astype(jnp.int32)

    v_pad = _round_up(v, _LANE)
    resident_bytes = 2 * v_pad * e * table.dtype.itemsize  # double-buffered
    use_pallas = (
        e % _LANE == 0
        and v_pad <= _MAX_ONEHOT_ROWS
        and resident_bytes <= _MAX_RESIDENT_TABLE_BYTES
    )
    if not use_pallas:
        # TODO(synk): a blocked manual-DMA row-gather kernel (table in pl.ANY,
        # double-buffered row DMAs) would cover the huge-V / narrow-E regimes;
        # fall back to XLA's gather for now.
        return jnp.take(table, flat_idx, axis=0).reshape(x.shape + (e,))

    if table_padded is None:
        table_padded = jnp.pad(table, ((0, v_pad - v), (0, 0)))

    out_flat = _class_embed_pallas(flat_idx, table_padded, block_rows=block_rows)
    return out_flat.reshape(x.shape + (e,))


class ClassEncoder:
    """Synthetic-parameter JAX port of the PyTorch ClassEncoder module."""

    def __init__(self, num_classes: int, emb_dim: int = 768, *, key=None,
                 dtype=jnp.float32):
        if key is None:
            key = jax.random.PRNGKey(0)
        # nn.Embedding default init is N(0, 1); deterministic synthetic weights.
        # (If downstream tolerates bf16, passing dtype=jnp.bfloat16 halves HBM
        #  write traffic and VMEM; the one-hot gather stays bit-exact.)
        self.embedding = jax.random.normal(
            key, (num_classes + 1, emb_dim), dtype=dtype
        )
        # Hoisted per-call work: lane-pad the static table once at init.
        v, e = self.embedding.shape
        v_pad = _round_up(v, _LANE)
        if e % _LANE == 0 and v_pad <= _MAX_ONEHOT_ROWS:
            self._table_padded = jnp.pad(self.embedding, ((0, v_pad - v), (0, 0)))
        else:
            self._table_padded = None

    def __call__(self, x):
        return class_encoder_forward(
            x, self.embedding, table_padded=self._table_padded
        )


if __name__ == "__main__":
    key = jax.random.PRNGKey(0)
    k_table, k_idx, k_table2 = jax.random.split(key, 3)

    # Small shapes consistent with the module: batch=2, seq=8, num_classes=10
    # (table has num_classes + 1 = 11 rows).  emb_dim=128 keeps the smoke test
    # small while staying lane-dense so the Pallas path is exercised (the
    # module's default is 768 = 6 x 128 lanes).
    num_classes = 10
    emb_dim = 128
    batch, seq = 2, 8

    enc = ClassEncoder(num_classes, emb_dim, key=k_table)
    x = jax.random.randint(
        k_idx, (batch, seq), minval=0, maxval=num_classes + 1, dtype=jnp.int32
    )

    out = jax.block_until_ready(enc(x))
    ref = jnp.take(enc.embedding, x, axis=0)
    assert out.shape == (batch, seq, emb_dim), out.shape
    assert jnp.allclose(out, ref, atol=1e-6), "Pallas embedding gather mismatch"

    # Guard-rail path: emb_dim=32 is not lane-dense -> routed to jnp.take.
    enc_small = ClassEncoder(num_classes, 32, key=k_table2)
    out_small = jax.block_until_ready(enc_small(x))
    ref_small = jnp.take(enc_small.embedding, x, axis=0)
    assert out_small.shape == (batch, seq, 32), out_small.shape
    assert jnp.allclose(out_small, ref_small, atol=1e-6), "fallback gather mismatch"

    print("KERNEL_OK")
</pallas_src>

<mosaic_0001>
module attributes {stable_mosaic.version = 11 : i64} {
  func.func @_class_embed_kernel(%arg0: i32, %arg1: memref<8x1xi32, #tpu.memory_space<vmem>>, %arg2: memref<128x128xf32, #tpu.memory_space<vmem>>, %arg3: memref<8x128xf32, #tpu.memory_space<vmem>>) attributes {dimension_semantics = [#tpu.dimension_semantics<parallel>], iteration_bounds = array<i64: 2>, scalar_prefetch = 0 : i64, scratch_operands = 0 : i64, tpu.core_type = #tpu.core_type<tc>, window_params = [{transform_indices = @transform_0, window_bounds = array<i64: 8, 1>}, {pipeline_mode = #tpu.pipeline_mode<synchronous>, transform_indices = @transform_1, window_bounds = array<i64: 128, 128>}, {transform_indices = @transform_2, window_bounds = array<i64: 8, 128>}]} {
    %c0 = arith.constant 0 : index
    %c0_0 = arith.constant 0 : index
    %0 = vector.load %arg1[%c0, %c0_0] : memref<8x1xi32, #tpu.memory_space<vmem>>, vector<8x1xi32>
    %1 = tpu.iota {dimensions = array<i32: 1>} : vector<8x128xi32>
    %2 = vector.broadcast %0 : vector<8x1xi32> to vector<8x128xi32>
    %3 = arith.cmpi eq, %2, %1 : vector<8x128xi32>
    %4 = arith.extui %3 : vector<8x128xi1> to vector<8x128xi32>
    %5 = arith.sitofp %4 : vector<8x128xi32> to vector<8x128xf32>
    %c0_1 = arith.constant 0 : index
    %c0_2 = arith.constant 0 : index
    %6 = vector.load %arg2[%c0_1, %c0_2] : memref<128x128xf32, #tpu.memory_space<vmem>>, vector<128x128xf32>
    %cst = arith.constant dense<0.000000e+00> : vector<8x128xf32>
    %7 = tpu.matmul %5, %6, %cst {dimension_numbers = #tpu.dot_dimension_numbers<[1], [0], [0], [1], [0, 0, 1, 1], [], []>} : vector<8x128xf32>, vector<128x128xf32>, vector<8x128xf32> -> vector<8x128xf32>
    %c0_3 = arith.constant 0 : index
    %c0_4 = arith.constant 0 : index
    %8 = vector.load %arg3[%c0_3, %c0_4] : memref<8x128xf32, #tpu.memory_space<vmem>>, vector<8x128xf32>
    tpu.vector_store %arg3[%c0_3, %c0_4], %7 {strides = array<i32>} : memref<8x128xf32, #tpu.memory_space<vmem>>, vector<8x128xf32>,
    return
  }
  func.func @transform_0(%arg0: i32) -> (i32, i32) {
    %c0_i32 = arith.constant 0 : i32
    %c0_i32_0 = arith.constant 0 : i32
    return %arg0, %c0_i32 : i32, i32
  }
  func.func @transform_1(%arg0: i32) -> (i32, i32) {
    %c0_i32 = arith.constant 0 : i32
    %c0_i32_0 = arith.constant 0 : i32
    %c0_i32_1 = arith.constant 0 : i32
    return %c0_i32, %c0_i32_0 : i32, i32
  }
  func.func @transform_2(%arg0: i32) -> (i32, i32) {
    %c0_i32 = arith.constant 0 : i32
    %c0_i32_0 = arith.constant 0 : i32
    return %arg0, %c0_i32 : i32, i32
  }
}

</mosaic_0001>

<llo_original>
// kernel: _class_embed_pallas.1
$region0: #{_class_embed_pallas.1}
  #allocation0 [shape = 'u32[]', space=smem, size = 0x4, offset = 0x4, fixed_abs, tag = 'smem constant byte address 0x4 - core index']
  #allocation1 [shape = 'u32[144,128]{1,0:T(1,128)}', space=vmem, size = 0x12000, scoped, tag = 'internal scratch']
  %s0 = inlined_call_operand.vmem [shape: s32[16,1], index: 0, kind: input, shape index: {}]
  %s1 = inlined_call_operand.hbm [shape: f32[128,128], index: 1, kind: input, shape index: {}]
  %s2 = inlined_call_operand.hbm [shape: f32[16,128], index: 2, kind: output, shape index: {}]
  %s3 = sld [smem:[#allocation0]]
  $region45: #{_class_embed_pallas.1} parent=0
    _
  %s5 = ssub.s32 1, %s3
  %s6 = scalar_select 0, %s5, %s3
  $region1: #{_class_embed_pallas.1} parent=0
    #allocation2 [shape = 'u8[65536]{0}', space=vmem, size = 0x10000, scoped, tag = 'input window, operand 1, single buffered']
    #allocation3 [shape = 's32[2]{0}', space=sflag, size = 0x8, scoped, tag = 'scoped memory for _class_embed_pallas.1']
    #allocation4 [shape = 's32[2]{0}', space=sflag, size = 0x8, scoped, tag = 'scoped memory for _class_embed_pallas.1']
    #allocation5 [shape = 'u8[8192]{0}', space=vmem, size = 0x2000, scoped, tag = 'output window, operand 0']
    %7 = vsyncpa [#allocation3], 0
    %8 = vsyncpa [#allocation4], 0
    %s9 = scalar_lea.sflag [#allocation4], 1
    %10 = vsyncpa %s9, 0
    loop: start=0, step=1, limit=4
    $region2: #{_class_embed_pallas.1} parent=1 // loop_pre_header
      _
    $region3: #{_class_embed_pallas.1} parent=1 // loop_header
      %s12 = sphi 0, %s16
      %p13 = scmp.ge.s32.totalorder %s12, 4
      %s22 = sphi 0, %s24
      %s25 = sphi 0, %s22
      %s26 = sphi 0, %s25
      %s42 = sphi 0, %s26
      %s46 = sphi 0, %s46
      %s48 = sphi 0, %s46
      %s49 = sphi 0, %s48
      %s63 = sphi 0, %s49
      %s69 = sphi 0, %s71
      %s72 = sphi 0, %s69
      %s73 = sphi 0, %s72
      %s89 = sphi 0, %s73
    $region4: #{_class_embed_pallas.1} parent=1 // loop_header_branch
      %15 = sbr.rel (%p13) target = $region8
    $region5: #{_class_embed_pallas.1} parent=1 // loop_body
      %s17 = ssub.s32 %s12, 1
      %s18 = ssub.s32 %s12, 2
      %s19 = sadd.s32 %s12, 1
      %s20 = ssub.s32 %s12, %s19
      %p21 = scmp.eq.s32.totalorder %s20, 0
      %s23 = sadd.s32 %s22, 1
      %s24 = scalar_select %p21, %s22, %s23
      %p27 = pneg %p21
      %p28 = scmp.eq.s32.totalorder %s12, 1
      %p29 = por %p27, %p28
      %p30 = scmp.ne.s32.totalorder %s22, %s25
      %p31 = scmp.eq.s32.totalorder %s12, 0
      %p32 = por %p30, %p31
      %p33 = scmp.ne.s32.totalorder %s22, %s25
      %p34 = scmp.eq.s32.totalorder %s17, 1
      %p35 = por %p33, %p34
      %p36 = scmp.ne.s32.totalorder %s25, %s26
      %p37 = scmp.eq.s32.totalorder %s17, 0
      %p38 = por %p36, %p37
      %p39 = scmp.ne.s32.totalorder %s25, %s26
      %p40 = scmp.eq.s32.totalorder %s18, 1
      %p41 = por %p39, %p40
      %p43 = scmp.ne.s32.totalorder %s26, %s42
      %p44 = scmp.eq.s32.totalorder %s18, 0
      %p45 = por %p43, %p44
      %s47 = sadd.s32 %s46, 1
      %p50 = scmp.eq.s32.totalorder %s12, 1
      %p51 = scmp.ne.s32.totalorder %s46, %s48
      %p52 = scmp.eq.s32.totalorder %s12, 0
      %p53 = por %p51, %p52
      %p54 = scmp.ne.s32.totalorder %s46, %s48
      %p55 = scmp.eq.s32.totalorder %s17, 1
      %p56 = por %p54, %p55
      %p57 = scmp.ne.s32.totalorder %s48, %s49
      %p58 = scmp.eq.s32.totalorder %s17, 0
      %p59 = por %p57, %p58
      %p60 = scmp.ne.s32.totalorder %s48, %s49
      %p61 = scmp.eq.s32.totalorder %s18, 1
      %p62 = por %p60, %p61
      %p64 = scmp.ne.s32.totalorder %s49, %s63
      %p65 = scmp.eq.s32.totalorder %s18, 0
      %p66 = por %p64, %p65
      %s67 = ssub.s32 %s12, %s19
      %p68 = scmp.eq.s32.totalorder %s67, 0
      %s70 = sadd.s32 %s69, 1
      %s71 = scalar_select %p68, %s69, %s70
      %p74 = pneg %p68
      %p75 = scmp.eq.s32.totalorder %s12, 1
      %p76 = por %p74, %p75
      %p77 = scmp.ne.s32.totalorder %s69, %s72
      %p78 = scmp.eq.s32.totalorder %s12, 0
      %p79 = por %p77, %p78
      %p80 = scmp.ne.s32.totalorder %s69, %s72
      %p81 = scmp.eq.s32.totalorder %s17, 1
      %p82 = por %p80, %p81
      %p83 = scmp.ne.s32.totalorder %s72, %s73
      %p84 = scmp.eq.s32.totalorder %s17, 0
      %p85 = por %p83, %p84
      %p86 = scmp.ne.s32.totalorder %s72, %s73
      %p87 = scmp.eq.s32.totalorder %s18, 1
      %p88 = por %p86, %p87
      %p90 = scmp.ne.s32.totalorder %s73, %s89
      %p91 = scmp.eq.s32.totalorder %s18, 0
      %p92 = por %p90, %p91
      %p93 = scmp.le.s32.totalorder 1, %s12
      %p94 = scmp.lt.s32.totalorder %s12, 3
      %p95 = pnand %p93, %p94
      %p96 = pneg %p95
      // Predicated region
      $region9: #{_class_embed_pallas.1} parent=5 // pred_check
        _
      $region10: #{_class_embed_pallas.1} parent=5 // pred_check_branch
        %98 = sbr.rel (%p95) target = $region12
      $region11: #{_class_embed_pallas.1} parent=5 // pred_region
        %s99 = ssub.s32 %s12, 1
        // Predicated region
        $region13: #{_class_embed_pallas.1} parent=11 // pred_check
          %p100 = pneg %p59
        $region14: #{_class_embed_pallas.1} parent=11 // pred_check_branch
          %102 = sbr.rel (%p100) target = $region16
        $region15: #{_class_embed_pallas.1} parent=11 // pred_region
          %s104 = ssub.s32 2048, 2048
          %105 = vsyncadd [#allocation3], %s104
          %s106 = sshll.u32 [#allocation2], 4
          %s107 = int_to_ptr.vmem [resolvable:$true] %s106
          %112 = dma.hbm_to_vmem [thread:$0]  %s1, 2048, %s107, [#allocation3], 128, 128, 8
        $region16: #{_class_embed_pallas.1} parent=11 // pred_fallthru
          _
      $region12: #{_class_embed_pallas.1} parent=5 // pred_fallthru
        _
      %p113 = scmp.lt.s32.totalorder %s12, 2
      // Predicated region
      $region17: #{_class_embed_pallas.1} parent=5 // pred_check
        %p114 = pneg %p113
      $region18: #{_class_embed_pallas.1} parent=5 // pred_check_branch
        %116 = sbr.rel (%p114) target = $region20
      $region19: #{_class_embed_pallas.1} parent=5 // pred_region
        // Predicated region
        $region21: #{_class_embed_pallas.1} parent=19 // pred_check
          %p117 = pneg %p32
        $region22: #{_class_embed_pallas.1} parent=19 // pred_check_branch
          %119 = sbr.rel (%p117) target = $region24
        $region23: #{_class_embed_pallas.1} parent=19 // pred_region
          %p120 = scmp.lt.s32.totalorder %s12, 1
          %s121 = scalar_select %p120, %s12, 1
          %s122 = smul.addr %s121, 8
          %s123 = scalar_lea.vmem %s0, %s122
        $region24: #{_class_embed_pallas.1} parent=19 // pred_fallthru
          _
      $region20: #{_class_embed_pallas.1} parent=5 // pred_fallthru
        _
      %p124 = scmp.le.s32.totalorder 1, %s12
      %p125 = scmp.lt.s32.totalorder %s12, 3
      %p126 = pnand %p124, %p125
      %p127 = pneg %p126
      // Predicated region
      $region25: #{_class_embed_pallas.1} parent=5 // pred_check
        _
      $region26: #{_class_embed_pallas.1} parent=5 // pred_check_branch
        %129 = sbr.rel (%p126) target = $region28
      $region27: #{_class_embed_pallas.1} parent=5 // pred_region
        %s130 = ssub.s32 %s12, 1
        // Predicated region
        $region29: #{_class_embed_pallas.1} parent=27 // pred_check
          %p131 = pneg %p59
        $region30: #{_class_embed_pallas.1} parent=27 // pred_check_branch
          %133 = sbr.rel (%p131) target = $region32
        $region31: #{_class_embed_pallas.1} parent=27 // pred_region
          %134 = dma.done [#allocation3], 2048
        $region32: #{_class_embed_pallas.1} parent=27 // pred_fallthru
          _
        %p135 = scmp.lt.s32.totalorder %s17, 1
        %s136 = scalar_select %p135, %s17, 1
        %s137 = smul.addr %s136, 8
        %s138 = scalar_lea.vmem %s0, %s137
        %p139 = pneg %p38
        %p140 = pneg %p35
        %p141 = pneg %p59
        %p142 = pneg %p56
        %p143 = pneg %p85
        %p144 = pneg %p82
        %s145 = sand.u32 %s72, 1
        %s146 = scalar_lea.sflag [#allocation4], %s145
        %s147 = sand.u32 %s72, 1
        %s148 = smul.addr %s147, 8
        %s149 = scalar_lea.vmem [#allocation5], %s148
        %p150 = scmp.lt.s32.totalorder %s17, 1
        %s151 = scalar_select %p150, %s17, 1
        %s152 = smul.addr %s151, 8
        %s153 = scalar_lea.vmem %s0, %s152
        %v154 = vld [vmem:[%s153] sm:$0xff]
        %v155 = vlaneseq
        %v156 = vand.u32 %v155, 127
        %157 = vset.pattern.permute.xlu0 0
        %158 = vperm.xlu0 %157, %v154
        %v159 = vpop.permute.xlu0 %158
        %vm160 = vcmp.eq.s32.totalorder %v159, %v156
        %v161 = vsel %vm160, 1, 0
        %v162 = vcvt.s32.f32 %v161
        %v163 = vld [vmem:[#allocation2] sm:$0xff]
        %v164 = vld [vmem:[#allocation2 + $0x8] sm:$0xff]
        %v165 = vld [vmem:[#allocation2 + $0x10] sm:$0xff]
        %v166 = vld [vmem:[#allocation2 + $0x18] sm:$0xff]
        %v167 = vld [vmem:[#allocation2 + $0x20] sm:$0xff]
        %v168 = vld [vmem:[#allocation2 + $0x28] sm:$0xff]
        %v169 = vld [vmem:[#allocation2 + $0x30] sm:$0xff]
        %v170 = vld [vmem:[#allocation2 + $0x38] sm:$0xff]
        %v171 = vld [vmem:[#allocation2 + $0x40] sm:$0xff]
        %v172 = vld [vmem:[#allocation2 + $0x48] sm:$0xff]
        %v173 = vld [vmem:[#allocation2 + $0x50] sm:$0xff]
        %v174 = vld [vmem:[#allocation2 + $0x58] sm:$0xff]
        %v175 = vld [vmem:[#allocation2 + $0x60] sm:$0xff]
        %v176 = vld [vmem:[#allocation2 + $0x68] sm:$0xff]
        %v177 = vld [vmem:[#allocation2 + $0x70] sm:$0xff]
        %v178 = vld [vmem:[#allocation2 + $0x78] sm:$0xff]
        %179 = vmatprep.subr.mxu0 0.0
        %180 = vmatpush1.msra.mxu0 %v178
        %181 = vmatprep.subr.mxu0 0.0
        %182 = vmatpush1.msra.mxu0 %v177
        %183 = vmatprep.subr.mxu0 0.0
        %184 = vmatpush1.msra.mxu0 %v176
        %185 = vmatprep.subr.mxu0 0.0
        %186 = vmatpush1.msra.mxu0 %v175
        %187 = vmatprep.subr.mxu0 0.0
        %188 = vmatpush1.msra.mxu0 %v174
        %189 = vmatprep.subr.mxu0 0.0
        %190 = vmatpush1.msra.mxu0 %v173
        %191 = vmatprep.subr.mxu0 0.0
        %192 = vmatpush1.msra.mxu0 %v172
        %193 = vmatprep.subr.mxu0 0.0
        %194 = vmatpush1.msra.mxu0 %v171
        %195 = vmatprep.subr.mxu0 0.0
        %196 = vmatpush1.msra.mxu0 %v170
        %197 = vmatprep.subr.mxu0 0.0
        %198 = vmatpush1.msra.mxu0 %v169
        %199 = vmatprep.subr.mxu0 0.0
        %200 = vmatpush1.msra.mxu0 %v168
        %201 = vmatprep.subr.mxu0 0.0
        %202 = vmatpush1.msra.mxu0 %v167
        %203 = vmatprep.subr.mxu0 0.0
        %204 = vmatpush1.msra.mxu0 %v166
        %205 = vmatprep.subr.mxu0 0.0
        %206 = vmatpush1.msra.mxu0 %v165
        %207 = vmatprep.subr.mxu0 0.0
        %208 = vmatpush1.msra.mxu0 %v164
        %209 = vmatprep.subr.mxu0 0.0
        %210 = vmatpush1.msra.mxu0 %v163
        %211 = vmatprep.subr.mxu0 0.0
        %212 = vmatpush2.msra.mxu0 0.0
        %213 = vmatprep.subr.mxu0 0.0
        %214 = vmatpush2.msra.mxu0 0.0
        %215 = vmatprep.subr.mxu0 0.0
        %216 = vmatpush2.msra.mxu0 0.0
        %217 = vmatprep.subr.mxu0 0.0
        %218 = vmatpush2.msra.mxu0 0.0
        %219 = vmatprep.subr.mxu0 0.0
        %220 = vmatpush2.msra.mxu0 0.0
        %221 = vmatprep.subr.mxu0 0.0
        %222 = vmatpush2.msra.mxu0 0.0
        %223 = vmatprep.subr.mxu0 0.0
        %224 = vmatpush2.msra.mxu0 0.0
        %225 = vmatprep.subr.mxu0 0.0
        %226 = vmatpush2.msra.mxu0 0.0
        %227 = vmatprep.subr.mxu0 0.0
        %228 = vmatpush2.msra.mxu0 0.0
        %229 = vmatprep.subr.mxu0 0.0
        %230 = vmatpush2.msra.mxu0 0.0
        %231 = vmatprep.subr.mxu0 0.0
        %232 = vmatpush2.msra.mxu0 0.0
        %233 = vmatprep.subr.mxu0 0.0
        %234 = vmatpush2.msra.mxu0 0.0
        %235 = vmatprep.subr.mxu0 0.0
        %236 = vmatpush2.msra.mxu0 0.0
        %237 = vmatprep.subr.mxu0 0.0
        %238 = vmatpush2.msra.mxu0 0.0
        %239 = vmatprep.subr.mxu0 0.0
        %240 = vmatpush2.msra.mxu0 0.0
        %241 = vmatprep.subr.mxu0 0.0
        %242 = vmatpush2.msra.mxu0 0.0
        %243 = vmatprep.mubr.f32.mxu0 0.0
        %244 = vmatmul.mubr.f32.gmra.mxu0 %v162
        %v245 = vpop.f32.mrf.mxu0
        %v246 = vadd.f32 0.0, %v245
        %v247 = vpop.f32.mrf.mxu0
        %248 = vdwg.mxu0
        %249 = vst [vmem:[%s149] sm:$0xff] %v246
        %s250 = sand.u32 %s72, 1
        %s251 = scalar_lea.sflag [#allocation4], %s250
        %s252 = sand.u32 %s72, 1
        %s253 = smul.addr %s252, 8
        %s254 = scalar_lea.vmem [#allocation5], %s253
        // Predicated region
        $region33: #{_class_embed_pallas.1} parent=27 // pred_check
          %p255 = pneg %p82
        $region34: #{_class_embed_pallas.1} parent=27 // pred_check_branch
          %257 = sbr.rel (%p255) target = $region36
        $region35: #{_class_embed_pallas.1} parent=27 // pred_region
          %s259 = ssub.s32 128, 128
          %260 = vsyncadd %s251, %s259
          %s261 = smul.addr %s17, 128
          %s262 = scalar_lea.hbm %s2, %s261
          %s264 = sshll.u32 %s254, 4
          %s265 = int_to_ptr.vmem [resolvable:$true] %s264
          %267 = dma.vmem_to_hbm [thread:$0]  %s265, 128, %s262, %s251
        $region36: #{_class_embed_pallas.1} parent=27 // pred_fallthru
          _
      $region28: #{_class_embed_pallas.1} parent=5 // pred_fallthru
        _
      %p268 = scmp.le.s32.totalorder 2, %s12
      // Predicated region
      $region37: #{_class_embed_pallas.1} parent=5 // pred_check
        %p269 = pneg %p268
      $region38: #{_class_embed_pallas.1} parent=5 // pred_check_branch
        %271 = sbr.rel (%p269) target = $region40
      $region39: #{_class_embed_pallas.1} parent=5 // pred_region
        %s272 = ssub.s32 %s12, 2
        // Predicated region
        $region41: #{_class_embed_pallas.1} parent=39 // pred_check
          %p273 = pneg %p88
        $region42: #{_class_embed_pallas.1} parent=39 // pred_check_branch
          %275 = sbr.rel (%p273) target = $region44
        $region43: #{_class_embed_pallas.1} parent=39 // pred_region
          %s276 = sand.u32 %s73, 1
          %s277 = scalar_lea.sflag [#allocation4], %s276
          %s278 = sand.u32 %s73, 1
          %s279 = smul.addr %s278, 8
          %s280 = scalar_lea.vmem [#allocation5], %s279
          %281 = dma.done %s277, 128
        $region44: #{_class_embed_pallas.1} parent=39 // pred_fallthru
          _
      $region40: #{_class_embed_pallas.1} parent=5 // pred_fallthru
        _
    $region6: #{_class_embed_pallas.1} parent=1 // loop_footer
      %s16 = sadd.s32 1, %s12
    $region7: #{_class_embed_pallas.1} parent=1 // loop_footer_branch
      %11 = sbr.rel target = $region3
    $region8: #{_class_embed_pallas.1} parent=1 // loop_exit
      _
    %282 = vsyncpa [#allocation3], 1
    %s283 = scalar_lea.sflag [#allocation3], 1
    %284 = vsyncpa %s283, 1
    %285 = vsyncpa [#allocation4], 1
    %s286 = scalar_lea.sflag [#allocation4], 1
    %287 = vsyncpa %s286, 1

</llo_original>
